<compile_context>
chip_gen: v5e
topology: v5e:2x2
jax: 0.10.0
libtpu: 0.0.40
codegen_flags: <defaults>
</compile_context>

<pallas_src>
import math
import jax
import jax.numpy as jnp
from jax import lax
from jax.experimental import pallas as pl
from jax.experimental.pallas import tpu as pltpu

# ----------------------------- config ---------------------------------------
NUM_STEPS = 100
BATCH = 4          # must be even (batch // 2 split like the torch code)
CHANNELS = 2
SEQLEN = 8
EMB_DIM = 8
TIME_DIM = 16
HIDDEN = 32
D = CHANNELS * SEQLEN                       # flattened per-sample feature size
W1_ROWS = D + TIME_DIM + EMB_DIM + 1        # [w1x; w1t; w1e; b1]
W2_ROWS = HIDDEN + 1                        # [w2; b2]


# ----------------------- time embedding (constant table) ---------------------
def time_embedding(t, dim):
    half = dim // 2
    freqs = jnp.exp(-math.log(10000.0) * jnp.arange(half, dtype=jnp.float32) / half)
    args = t.astype(jnp.float32)[:, None] * freqs[None, :]
    return jnp.concatenate([jnp.sin(args), jnp.cos(args)], axis=-1)  # (N, dim)


# ----------------------- diffusion schedule (plain JAX glue) ----------------
def make_schedule(num_steps=NUM_STEPS):
    betas = jnp.linspace(-6.0, 6.0, num_steps)
    betas = jax.nn.sigmoid(betas) * (0.005 - 1e-05) + 1e-05
    alphas = 1.0 - betas
    alphas_prod = jnp.cumprod(alphas, 0)
    alphas_prod_p = jnp.concatenate([jnp.ones((1,), jnp.float32), alphas_prod[:-1]], 0)
    abar_sqrt = jnp.sqrt(alphas_prod)
    ombar_sqrt = jnp.sqrt(1.0 - alphas_prod)
    return {
        "betas": betas,
        "alphas": alphas,
        "alphas_prod": alphas_prod,
        "alphas_prod_p": alphas_prod_p,
        "alphas_bar_sqrt": abar_sqrt,
        "one_minus_alphas_bar_log": jnp.log(1.0 - alphas_prod),
        "one_minus_alphas_bar_sqrt": ombar_sqrt,
        # packed (2*T,) SMEM table for in-kernel per-sample gather:
        #   [alphas_bar_sqrt | one_minus_alphas_bar_sqrt]
        "sched_packed": jnp.concatenate([abar_sqrt, ombar_sqrt], 0).astype(jnp.float32),
        # constant sinusoidal time-embedding table, row-gathered by t in-kernel
        "temb_table": time_embedding(jnp.arange(num_steps), TIME_DIM).astype(jnp.float32),
    }


def init_denoiser_params(key):
    ks = jax.random.split(key, 4)
    s = 0.05
    w1x = jax.random.normal(ks[0], (D, HIDDEN)) * s
    w1t = jax.random.normal(ks[1], (TIME_DIM, HIDDEN)) * s
    w1e = jax.random.normal(ks[2], (EMB_DIM, HIDDEN)) * s
    b1 = jnp.zeros((1, HIDDEN), jnp.float32)
    w2 = jax.random.normal(ks[3], (HIDDEN, D)) * s
    b2 = jnp.zeros((1, D), jnp.float32)
    # two packed weight slabs -> two weight DMAs; slice offsets (0,16,32,40)
    # and (0,32) are all multiples of 8 sublanes.
    w1b1 = jnp.concatenate([w1x, w1t, w1e, b1], axis=0).astype(jnp.float32)  # (41, H)
    w2b2 = jnp.concatenate([w2, b2], axis=0).astype(jnp.float32)             # (33, D)
    return {"w1b1": w1b1, "w2b2": w2b2}


# ----------------------------- Pallas kernel ---------------------------------
def diffusion_loss_kernel(t_ref, sched_ref, temb_tab_ref,
                          x0_ref, e_ref, emb_ref, w1b1_ref, w2b2_ref,
                          loss_ref):
    B = x0_ref.shape[0]
    x0 = x0_ref[...]                        # (B, D)
    e = e_ref[...]                          # (B, D) — lanes [0, D), aligned w/ eps_hat
    emb = emb_ref[...]                      # (B, EMB_DIM)

    # Per-sample schedule gather (scalar SMEM reads) + time-embedding row
    # gather (dynamic VMEM row load), assembled into vregs via row selects.
    row = lax.broadcasted_iota(jnp.int32, (B, 1), 0)
    a_vec = jnp.zeros((B, 1), jnp.float32)
    aml_vec = jnp.zeros((B, 1), jnp.float32)
    temb = jnp.zeros((B, TIME_DIM), jnp.float32)
    for i in range(B):                      # B is tiny & static -> unrolled
        ti = t_ref[i]
        m = row == i
        a_vec = jnp.where(m, sched_ref[ti], a_vec)                    # sqrt(abar[t])
        aml_vec = jnp.where(m, sched_ref[NUM_STEPS + ti], aml_vec)    # sqrt(1-abar[t])
        temb = jnp.where(m, temb_tab_ref[pl.ds(ti, 1), :], temb)      # (1,TIME_DIM)

    # q(x_t | x_0): row-broadcast scale (VPU only; no column iota / selects)
    xin = x0 * a_vec + e * aml_vec          # (B, D)

    # first layer: xin@w1x + temb@w1t + emb@w1e + b1   (weight slab pre-stacked)
    w1x = w1b1_ref[0:D, :]
    w1t = w1b1_ref[D:D + TIME_DIM, :]
    w1e = w1b1_ref[D + TIME_DIM:D + TIME_DIM + EMB_DIM, :]
    b1 = w1b1_ref[D + TIME_DIM + EMB_DIM:W1_ROWS, :]
    h = (jnp.dot(xin, w1x, preferred_element_type=jnp.float32)
         + jnp.dot(temb, w1t, preferred_element_type=jnp.float32)
         + jnp.dot(emb, w1e, preferred_element_type=jnp.float32)
         + b1)
    h = jnp.maximum(h, 0.0)

    w2 = w2b2_ref[0:HIDDEN, :]
    b2 = w2b2_ref[HIDDEN:W2_ROWS, :]
    eps_hat = jnp.dot(h, w2, preferred_element_type=jnp.float32) + b2   # (B, D)

    # loss = mean((e - eps_hat)^2) ; e and eps_hat share lanes [0, D) -> VPU sub
    diff = e - eps_hat
    loss_ref[0, 0] = jnp.sum(diff * diff) * (1.0 / (B * D))


def _pallas_diffusion_loss(t, sched, temb_tab, x0f, e, emb, w1b1, w2b2):
    smem = pl.BlockSpec(memory_space=pltpu.MemorySpace.SMEM)
    vmem = pl.BlockSpec(memory_space=pltpu.MemorySpace.VMEM)
    flops = 2 * BATCH * (D * HIDDEN + TIME_DIM * HIDDEN + EMB_DIM * HIDDEN + HIDDEN * D)
    bytes_accessed = 4 * (t.size + sched.size + temb_tab.size + x0f.size
                          + e.size + emb.size + w1b1.size + w2b2.size) + 4
    return pl.pallas_call(
        diffusion_loss_kernel,
        out_shape=jax.ShapeDtypeStruct((1, 1), jnp.float32),
        in_specs=[smem, smem, vmem, vmem, vmem, vmem, vmem, vmem],
        out_specs=pl.BlockSpec(memory_space=pltpu.MemorySpace.SMEM),
        cost_estimate=pl.CostEstimate(
            flops=flops, transcendentals=0, bytes_accessed=bytes_accessed),
    )(t, sched, temb_tab, x0f, e, emb, w1b1, w2b2)


# ----------------------------- forward wrapper -------------------------------
def simple_diffusion_forward(x0, emb, schedule, params, key):
    """Mirrors SimpleDiffusion.forward == diffusion_loss_fn."""
    B, C, L = x0.shape
    key_t, key_e = jax.random.split(key)

    # t = cat([randint(0, T, B//2), T-1-t])
    half = B // 2
    t_half = jax.random.randint(key_t, (half,), 0, NUM_STEPS, dtype=jnp.int32)
    t = jnp.concatenate([t_half, NUM_STEPS - 1 - t_half], axis=0)      # (B,)

    # e = randn_like(x_0)   (schedule gather, time embedding and q(x_t|x_0)
    # mixing all happen inside the kernel now)
    e = jax.random.normal(key_e, (B, C * L), dtype=jnp.float32)
    x0f = x0.reshape(B, C * L).astype(jnp.float32)

    loss = _pallas_diffusion_loss(
        t, schedule["sched_packed"], schedule["temb_table"],
        x0f, e, emb.astype(jnp.float32),
        params["w1b1"], params["w2b2"])
    return loss[0, 0]


# ----------------------------------- main ------------------------------------
if __name__ == "__main__":
    root = jax.random.PRNGKey(0)
    k_x, k_emb, k_params, k_fwd = jax.random.split(root, 4)

    x0 = jax.random.normal(k_x, (BATCH, CHANNELS, SEQLEN), dtype=jnp.float32)
    emb = jax.random.normal(k_emb, (BATCH, EMB_DIM), dtype=jnp.float32)

    schedule = make_schedule()
    params = init_denoiser_params(k_params)

    fwd = jax.jit(simple_diffusion_forward)   # fuse the remaining RNG/reshape glue
    loss = fwd(x0, emb, schedule, params, k_fwd)
    loss = jax.block_until_ready(loss)

    assert loss.shape == () and bool(jnp.isfinite(loss))
    print("KERNEL_OK")
</pallas_src>

<mosaic_0001>
module attributes {stable_mosaic.version = 11 : i64} {
  func.func @diffusion_loss_kernel(%arg0: memref<4xi32, #tpu.memory_space<smem>>, %arg1: memref<200xf32, #tpu.memory_space<smem>>, %arg2: memref<100x16xf32, #tpu.memory_space<vmem>>, %arg3: memref<4x16xf32, #tpu.memory_space<vmem>>, %arg4: memref<4x16xf32, #tpu.memory_space<vmem>>, %arg5: memref<4x8xf32, #tpu.memory_space<vmem>>, %arg6: memref<41x32xf32, #tpu.memory_space<vmem>>, %arg7: memref<33x16xf32, #tpu.memory_space<vmem>>, %arg8: memref<1x1xf32, #tpu.memory_space<smem>>) attributes {dimension_semantics = [], scalar_prefetch = 0 : i64, scratch_operands = 0 : i64, tpu.core_type = #tpu.core_type<tc>} {
    %c0 = arith.constant 0 : index
    %c0_0 = arith.constant 0 : index
    %0 = vector.load %arg3[%c0, %c0_0] : memref<4x16xf32, #tpu.memory_space<vmem>>, vector<4x16xf32>
    %c0_1 = arith.constant 0 : index
    %c0_2 = arith.constant 0 : index
    %1 = vector.load %arg4[%c0_1, %c0_2] : memref<4x16xf32, #tpu.memory_space<vmem>>, vector<4x16xf32>
    %c0_3 = arith.constant 0 : index
    %c0_4 = arith.constant 0 : index
    %2 = vector.load %arg5[%c0_3, %c0_4] : memref<4x8xf32, #tpu.memory_space<vmem>>, vector<4x8xf32>
    %3 = tpu.iota {dimensions = array<i32: 0>} : vector<4x1xi32>
    %cst = arith.constant 0.000000e+00 : f32
    %4 = vector.broadcast %cst : f32 to vector<4x1xf32>
    %cst_5 = arith.constant 0.000000e+00 : f32
    %5 = vector.broadcast %cst_5 : f32 to vector<4x1xf32>
    %cst_6 = arith.constant 0.000000e+00 : f32
    %6 = vector.broadcast %cst_6 : f32 to vector<4x16xf32>
    %c0_7 = arith.constant 0 : index
    %7 = memref.load %arg0[%c0_7] : memref<4xi32, #tpu.memory_space<smem>>
    %c0_i32 = arith.constant 0 : i32
    %8 = vector.broadcast %c0_i32 : i32 to vector<4x1xi32>
    %9 = arith.cmpi eq, %3, %8 : vector<4x1xi32>
    %10 = arith.index_cast %7 : i32 to index
    %11 = memref.load %arg1[%10] : memref<200xf32, #tpu.memory_space<smem>>
    %12 = vector.broadcast %11 : f32 to vector<4x1xf32>
    %13 = arith.select %9, %12, %4 : vector<4x1xi1>, vector<4x1xf32>
    %c100_i32 = arith.constant 100 : i32
    %14 = arith.addi %c100_i32, %7 : i32
    %15 = arith.index_cast %14 : i32 to index
    %16 = memref.load %arg1[%15] : memref<200xf32, #tpu.memory_space<smem>>
    %17 = vector.broadcast %16 : f32 to vector<4x1xf32>
    %18 = arith.select %9, %17, %5 : vector<4x1xi1>, vector<4x1xf32>
    %19 = arith.index_cast %7 : i32 to index
    %c0_8 = arith.constant 0 : index
    %20 = vector.load %arg2[%19, %c0_8] : memref<100x16xf32, #tpu.memory_space<vmem>>, vector<1x16xf32>
    %21 = vector.shape_cast %9 : vector<4x1xi1> to vector<4x1xi1>
    %22 = vector.broadcast %21 : vector<4x1xi1> to vector<4x16xi1>
    %23 = vector.shape_cast %20 : vector<1x16xf32> to vector<1x16xf32>
    %24 = vector.broadcast %23 : vector<1x16xf32> to vector<4x16xf32>
    %25 = arith.select %22, %24, %6 : vector<4x16xi1>, vector<4x16xf32>
    %c1 = arith.constant 1 : index
    %26 = memref.load %arg0[%c1] : memref<4xi32, #tpu.memory_space<smem>>
    %c1_i32 = arith.constant 1 : i32
    %27 = vector.broadcast %c1_i32 : i32 to vector<4x1xi32>
    %28 = arith.cmpi eq, %3, %27 : vector<4x1xi32>
    %29 = arith.index_cast %26 : i32 to index
    %30 = memref.load %arg1[%29] : memref<200xf32, #tpu.memory_space<smem>>
    %31 = vector.broadcast %30 : f32 to vector<4x1xf32>
    %32 = arith.select %28, %31, %13 : vector<4x1xi1>, vector<4x1xf32>
    %c100_i32_9 = arith.constant 100 : i32
    %33 = arith.addi %c100_i32_9, %26 : i32
    %34 = arith.index_cast %33 : i32 to index
    %35 = memref.load %arg1[%34] : memref<200xf32, #tpu.memory_space<smem>>
    %36 = vector.broadcast %35 : f32 to vector<4x1xf32>
    %37 = arith.select %28, %36, %18 : vector<4x1xi1>, vector<4x1xf32>
    %38 = arith.index_cast %26 : i32 to index
    %c0_10 = arith.constant 0 : index
    %39 = vector.load %arg2[%38, %c0_10] : memref<100x16xf32, #tpu.memory_space<vmem>>, vector<1x16xf32>
    %40 = vector.shape_cast %28 : vector<4x1xi1> to vector<4x1xi1>
    %41 = vector.broadcast %40 : vector<4x1xi1> to vector<4x16xi1>
    %42 = vector.shape_cast %39 : vector<1x16xf32> to vector<1x16xf32>
    %43 = vector.broadcast %42 : vector<1x16xf32> to vector<4x16xf32>
    %44 = arith.select %41, %43, %25 : vector<4x16xi1>, vector<4x16xf32>
    %c2 = arith.constant 2 : index
    %45 = memref.load %arg0[%c2] : memref<4xi32, #tpu.memory_space<smem>>
    %c2_i32 = arith.constant 2 : i32
    %46 = vector.broadcast %c2_i32 : i32 to vector<4x1xi32>
    %47 = arith.cmpi eq, %3, %46 : vector<4x1xi32>
    %48 = arith.index_cast %45 : i32 to index
    %49 = memref.load %arg1[%48] : memref<200xf32, #tpu.memory_space<smem>>
    %50 = vector.broadcast %49 : f32 to vector<4x1xf32>
    %51 = arith.select %47, %50, %32 : vector<4x1xi1>, vector<4x1xf32>
    %c100_i32_11 = arith.constant 100 : i32
    %52 = arith.addi %c100_i32_11, %45 : i32
    %53 = arith.index_cast %52 : i32 to index
    %54 = memref.load %arg1[%53] : memref<200xf32, #tpu.memory_space<smem>>
    %55 = vector.broadcast %54 : f32 to vector<4x1xf32>
    %56 = arith.select %47, %55, %37 : vector<4x1xi1>, vector<4x1xf32>
    %57 = arith.index_cast %45 : i32 to index
    %c0_12 = arith.constant 0 : index
    %58 = vector.load %arg2[%57, %c0_12] : memref<100x16xf32, #tpu.memory_space<vmem>>, vector<1x16xf32>
    %59 = vector.shape_cast %47 : vector<4x1xi1> to vector<4x1xi1>
    %60 = vector.broadcast %59 : vector<4x1xi1> to vector<4x16xi1>
    %61 = vector.shape_cast %58 : vector<1x16xf32> to vector<1x16xf32>
    %62 = vector.broadcast %61 : vector<1x16xf32> to vector<4x16xf32>
    %63 = arith.select %60, %62, %44 : vector<4x16xi1>, vector<4x16xf32>
    %c3 = arith.constant 3 : index
    %64 = memref.load %arg0[%c3] : memref<4xi32, #tpu.memory_space<smem>>
    %c3_i32 = arith.constant 3 : i32
    %65 = vector.broadcast %c3_i32 : i32 to vector<4x1xi32>
    %66 = arith.cmpi eq, %3, %65 : vector<4x1xi32>
    %67 = arith.index_cast %64 : i32 to index
    %68 = memref.load %arg1[%67] : memref<200xf32, #tpu.memory_space<smem>>
    %69 = vector.broadcast %68 : f32 to vector<4x1xf32>
    %70 = arith.select %66, %69, %51 : vector<4x1xi1>, vector<4x1xf32>
    %c100_i32_13 = arith.constant 100 : i32
    %71 = arith.addi %c100_i32_13, %64 : i32
    %72 = arith.index_cast %71 : i32 to index
    %73 = memref.load %arg1[%72] : memref<200xf32, #tpu.memory_space<smem>>
    %74 = vector.broadcast %73 : f32 to vector<4x1xf32>
    %75 = arith.select %66, %74, %56 : vector<4x1xi1>, vector<4x1xf32>
    %76 = arith.index_cast %64 : i32 to index
    %c0_14 = arith.constant 0 : index
    %77 = vector.load %arg2[%76, %c0_14] : memref<100x16xf32, #tpu.memory_space<vmem>>, vector<1x16xf32>
    %78 = vector.shape_cast %66 : vector<4x1xi1> to vector<4x1xi1>
    %79 = vector.broadcast %78 : vector<4x1xi1> to vector<4x16xi1>
    %80 = vector.shape_cast %77 : vector<1x16xf32> to vector<1x16xf32>
    %81 = vector.broadcast %80 : vector<1x16xf32> to vector<4x16xf32>
    %82 = arith.select %79, %81, %63 : vector<4x16xi1>, vector<4x16xf32>
    %83 = vector.broadcast %70 : vector<4x1xf32> to vector<4x16xf32>
    %84 = arith.mulf %0, %83 : vector<4x16xf32>
    %85 = vector.broadcast %75 : vector<4x1xf32> to vector<4x16xf32>
    %86 = arith.mulf %1, %85 : vector<4x16xf32>
    %87 = arith.addf %84, %86 : vector<4x16xf32>
    %c0_15 = arith.constant 0 : index
    %c0_16 = arith.constant 0 : index
    %88 = vector.load %arg6[%c0_15, %c0_16] : memref<41x32xf32, #tpu.memory_space<vmem>>, vector<16x32xf32>
    %c16 = arith.constant 16 : index
    %c0_17 = arith.constant 0 : index
    %89 = vector.load %arg6[%c16, %c0_17] : memref<41x32xf32, #tpu.memory_space<vmem>>, vector<16x32xf32>
    %c32 = arith.constant 32 : index
    %c0_18 = arith.constant 0 : index
    %90 = vector.load %arg6[%c32, %c0_18] : memref<41x32xf32, #tpu.memory_space<vmem>>, vector<8x32xf32>
    %c40 = arith.constant 40 : index
    %c0_19 = arith.constant 0 : index
    %91 = vector.load %arg6[%c40, %c0_19] : memref<41x32xf32, #tpu.memory_space<vmem>>, vector<1x32xf32>
    %cst_20 = arith.constant dense<0.000000e+00> : vector<4x32xf32>
    %92 = tpu.matmul %87, %88, %cst_20 {dimension_numbers = #tpu.dot_dimension_numbers<[1], [0], [0], [1], [0, 0, 1, 1], [], []>} : vector<4x16xf32>, vector<16x32xf32>, vector<4x32xf32> -> vector<4x32xf32>
    %cst_21 = arith.constant dense<0.000000e+00> : vector<4x32xf32>
    %93 = tpu.matmul %82, %89, %cst_21 {dimension_numbers = #tpu.dot_dimension_numbers<[1], [0], [0], [1], [0, 0, 1, 1], [], []>} : vector<4x16xf32>, vector<16x32xf32>, vector<4x32xf32> -> vector<4x32xf32>
    %94 = arith.addf %92, %93 : vector<4x32xf32>
    %cst_22 = arith.constant dense<0.000000e+00> : vector<4x32xf32>
    %95 = tpu.matmul %2, %90, %cst_22 {dimension_numbers = #tpu.dot_dimension_numbers<[1], [0], [0], [1], [0, 0, 1, 1], [], []>} : vector<4x8xf32>, vector<8x32xf32>, vector<4x32xf32> -> vector<4x32xf32>
    %96 = arith.addf %94, %95 : vector<4x32xf32>
    %97 = vector.broadcast %91 : vector<1x32xf32> to vector<4x32xf32>
    %98 = arith.addf %96, %97 : vector<4x32xf32>
    %cst_23 = arith.constant 0.000000e+00 : f32
    %99 = vector.broadcast %cst_23 : f32 to vector<4x32xf32>
    %100 = arith.maximumf %98, %99 : vector<4x32xf32>
    %c0_24 = arith.constant 0 : index
    %c0_25 = arith.constant 0 : index
    %101 = vector.load %arg7[%c0_24, %c0_25] : memref<33x16xf32, #tpu.memory_space<vmem>>, vector<32x16xf32>
    %c32_26 = arith.constant 32 : index
    %c0_27 = arith.constant 0 : index
    %102 = vector.load %arg7[%c32_26, %c0_27] : memref<33x16xf32, #tpu.memory_space<vmem>>, vector<1x16xf32>
    %cst_28 = arith.constant dense<0.000000e+00> : vector<4x16xf32>
    %103 = tpu.matmul %100, %101, %cst_28 {dimension_numbers = #tpu.dot_dimension_numbers<[1], [0], [0], [1], [0, 0, 1, 1], [], []>} : vector<4x32xf32>, vector<32x16xf32>, vector<4x16xf32> -> vector<4x16xf32>
    %104 = vector.broadcast %102 : vector<1x16xf32> to vector<4x16xf32>
    %105 = arith.addf %103, %104 : vector<4x16xf32>
    %106 = arith.subf %1, %105 : vector<4x16xf32>
    %107 = arith.mulf %106, %106 : vector<4x16xf32>
    %108 = vector.shape_cast %107 : vector<4x16xf32> to vector<1x4x16xf32>
    %cst_29 = arith.constant dense<0.000000e+00> : vector<1xf32>
    %109 = vector.multi_reduction <add>, %108, %cst_29 [1, 2] : vector<1x4x16xf32> to vector<1xf32>
    %110 = vector.shape_cast %109 : vector<1xf32> to vector<1x1x1xf32>
    %111 = vector.extract %110[0, 0, 0] : f32 from vector<1x1x1xf32>
    %cst_30 = arith.constant 1.562500e-02 : f32
    %112 = arith.mulf %111, %cst_30 : f32
    %c0_31 = arith.constant 0 : index
    %c0_32 = arith.constant 0 : index
    %113 = memref.load %arg8[%c0_31, %c0_32] : memref<1x1xf32, #tpu.memory_space<smem>>
    memref.store %112, %arg8[%c0_31, %c0_32] : memref<1x1xf32, #tpu.memory_space<smem>>
    return
  }
}

</mosaic_0001>

<llo_original>
// kernel: simple_diffusion_forward.21
$region0: #{simple_diffusion_forward.21}
  #allocation0 [shape = 'u32[]', space=smem, size = 0x4, offset = 0x4, fixed_abs, tag = 'smem constant byte address 0x4 - core index']
  #allocation1 [shape = 'u32[72,128]{1,0:T(1,128)}', space=vmem, size = 0x9000, scoped, tag = 'internal scratch']
  %s0 = inlined_call_operand.vmem [shape: s32[4], index: 0, kind: input, shape index: {}]
  %s1 = inlined_call_operand.vmem [shape: f32[200], index: 1, kind: input, shape index: {}]
  %s2 = inlined_call_operand.vmem [shape: f32[100,16], index: 2, kind: input, shape index: {}]
  %s3 = inlined_call_operand.vmem [shape: f32[4,16], index: 3, kind: input, shape index: {}]
  %s4 = inlined_call_operand.vmem [shape: f32[4,16], index: 4, kind: input, shape index: {}]
  %s5 = inlined_call_operand.vmem [shape: f32[4,8], index: 5, kind: input, shape index: {}]
  %s6 = inlined_call_operand.vmem [shape: f32[41,32], index: 6, kind: input, shape index: {}]
  %s7 = inlined_call_operand.vmem [shape: f32[33,16], index: 7, kind: input, shape index: {}]
  %s8 = inlined_call_operand.hbm [shape: f32[1,1], index: 8, kind: output, shape index: {}]
  %s9 = sld [smem:[#allocation0]]
  $region50: #{simple_diffusion_forward.21} parent=0
    _
  %s11 = ssub.s32 1, %s9
  %s12 = scalar_select 0, %s11, %s9
  $region1: #{simple_diffusion_forward.21} parent=0
    #allocation2 [shape = 'u8[512]{0}', space=smem, size = 0x200, scoped, tag = 'input window, operand 0, single buffered']
    #allocation3 [shape = 's32[1]{0}', space=sflag, size = 0x4, scoped, tag = 'scoped memory for simple_diffusion_forward.21']
    #allocation4 [shape = 's32[1]{0}', space=sflag, size = 0x4, scoped, tag = 'scoped memory for simple_diffusion_forward.21']
    #allocation5 [shape = 'u8[1024]{0}', space=smem, size = 0x400, scoped, tag = 'input window, operand 1, single buffered']
    #allocation6 [shape = 's32[1]{0}', space=sflag, size = 0x4, scoped, tag = 'scoped memory for simple_diffusion_forward.21']
    #allocation7 [shape = 'u8[512]{0}', space=smem, size = 0x200, scoped, tag = 'output window, operand 0, single buffered']
    %13 = vsyncpa [#allocation4], 0
    %14 = vsyncpa [#allocation6], 0
    %15 = vsyncpa [#allocation3], 0
    // Predicated region
    $region2: #{simple_diffusion_forward.21} parent=1 // pred_check
      _
    $region3: #{simple_diffusion_forward.21} parent=1 // pred_check_branch
      %17 = sbr.rel (0) target = $region5
    $region4: #{simple_diffusion_forward.21} parent=1 // pred_region
      %19 = vsyncadd [#allocation4], 0
      %s21 = sshll.u32 %s0, 4
      %s22 = int_to_ptr.vmem [resolvable:$true] %s21
      %24 = dma.vmem_to_smem %s22, 16, [#allocation2], [#allocation4]
    $region5: #{simple_diffusion_forward.21} parent=1 // pred_fallthru
      _
    // Predicated region
    $region6: #{simple_diffusion_forward.21} parent=1 // pred_check
      _
    $region7: #{simple_diffusion_forward.21} parent=1 // pred_check_branch
      %26 = sbr.rel (0) target = $region9
    $region8: #{simple_diffusion_forward.21} parent=1 // pred_region
      %28 = vsyncadd [#allocation6], 0
      %s30 = sshll.u32 %s1, 4
      %s31 = int_to_ptr.vmem [resolvable:$true] %s30
      %33 = dma.vmem_to_smem %s31, 32, [#allocation5], [#allocation6]
    $region9: #{simple_diffusion_forward.21} parent=1 // pred_fallthru
      _
    // Predicated region
    $region10: #{simple_diffusion_forward.21} parent=1 // pred_check
      _
    $region11: #{simple_diffusion_forward.21} parent=1 // pred_check_branch
      %35 = sbr.rel (0) target = $region13
    $region12: #{simple_diffusion_forward.21} parent=1 // pred_region
      _
    $region13: #{simple_diffusion_forward.21} parent=1 // pred_fallthru
      _
    // Predicated region
    $region14: #{simple_diffusion_forward.21} parent=1 // pred_check
      _
    $region15: #{simple_diffusion_forward.21} parent=1 // pred_check_branch
      %37 = sbr.rel (0) target = $region17
    $region16: #{simple_diffusion_forward.21} parent=1 // pred_region
      _
    $region17: #{simple_diffusion_forward.21} parent=1 // pred_fallthru
      _
    // Predicated region
    $region18: #{simple_diffusion_forward.21} parent=1 // pred_check
      _
    $region19: #{simple_diffusion_forward.21} parent=1 // pred_check_branch
      %39 = sbr.rel (0) target = $region21
    $region20: #{simple_diffusion_forward.21} parent=1 // pred_region
      _
    $region21: #{simple_diffusion_forward.21} parent=1 // pred_fallthru
      _
    // Predicated region
    $region22: #{simple_diffusion_forward.21} parent=1 // pred_check
      _
    $region23: #{simple_diffusion_forward.21} parent=1 // pred_check_branch
      %41 = sbr.rel (0) target = $region25
    $region24: #{simple_diffusion_forward.21} parent=1 // pred_region
      _
    $region25: #{simple_diffusion_forward.21} parent=1 // pred_fallthru
      _
    // Predicated region
    $region26: #{simple_diffusion_forward.21} parent=1 // pred_check
      _
    $region27: #{simple_diffusion_forward.21} parent=1 // pred_check_branch
      %43 = sbr.rel (0) target = $region29
    $region28: #{simple_diffusion_forward.21} parent=1 // pred_region
      _
    $region29: #{simple_diffusion_forward.21} parent=1 // pred_fallthru
      _
    // Predicated region
    $region30: #{simple_diffusion_forward.21} parent=1 // pred_check
      _
    $region31: #{simple_diffusion_forward.21} parent=1 // pred_check_branch
      %45 = sbr.rel (0) target = $region33
    $region32: #{simple_diffusion_forward.21} parent=1 // pred_region
      _
    $region33: #{simple_diffusion_forward.21} parent=1 // pred_fallthru
      _
    // Predicated region
    $region34: #{simple_diffusion_forward.21} parent=1 // pred_check
      _
    $region35: #{simple_diffusion_forward.21} parent=1 // pred_check_branch
      %47 = sbr.rel (0) target = $region37
    $region36: #{simple_diffusion_forward.21} parent=1 // pred_region
      %49 = dma.done [#allocation4], 16
    $region37: #{simple_diffusion_forward.21} parent=1 // pred_fallthru
      _
    // Predicated region
    $region38: #{simple_diffusion_forward.21} parent=1 // pred_check
      _
    $region39: #{simple_diffusion_forward.21} parent=1 // pred_check_branch
      %51 = sbr.rel (0) target = $region41
    $region40: #{simple_diffusion_forward.21} parent=1 // pred_region
      %53 = dma.done [#allocation6], 32
    $region41: #{simple_diffusion_forward.21} parent=1 // pred_fallthru
      _
    %54 = sfence
    %v55 = vld [vmem:[%s3] sm:$0xf]
    %v56 = vld [vmem:[%s4] sm:$0xf]
    %v57 = vld [vmem:[%s5] sm:$0xf]
    %v58 = vlaneseq
    %v59 = vshrl.u32 %v58, 7
    %s60 = sld [smem:[#allocation2]]
    %vm61 = vcmp.eq.s32.totalorder %v59, 0
    %s62 = sld [smem:[#allocation5 + %s60]]
    %v63 = vstv %s62
    %v64 = vsel %vm61, %v63, 0.0
    %s65 = sadd.s32 %s60, 100
    %s66 = sld [smem:[#allocation5 + %s65]]
    %v67 = vstv %s66
    %v68 = vsel %vm61, %v67, 0.0
    %s69 = scalar_lea.vmem %s2, %s60
    %v70 = vld [vmem:[%s69] sm:$0x1]
    %v71 = vsel %vm61, 1, 0
    %vm72 = vcmp.eq.s32.totalorder %v71, 1
    %v73 = vperm.slane %v70, 0
    %v74 = vsel %vm72, %v73, 0.0
    %s75 = sld [smem:[#allocation2 + $0x1]]
    %vm76 = vcmp.eq.s32.totalorder %v59, 1
    %s77 = sld [smem:[#allocation5 + %s75]]
    %v78 = vstv %s77
    %v79 = vsel %vm76, %v78, %v64
    %s80 = sadd.s32 %s75, 100
    %s81 = sld [smem:[#allocation5 + %s80]]
    %v82 = vstv %s81
    %v83 = vsel %vm76, %v82, %v68
    %s84 = scalar_lea.vmem %s2, %s75
    %v85 = vld [vmem:[%s84] sm:$0x1]
    %v86 = vsel %vm76, 1, 0
    %vm87 = vcmp.eq.s32.totalorder %v86, 1
    %v88 = vperm.slane %v85, 0
    %v89 = vsel %vm87, %v88, %v74
    %s90 = sld [smem:[#allocation2 + $0x2]]
    %vm91 = vcmp.eq.s32.totalorder %v59, 2
    %s92 = sld [smem:[#allocation5 + %s90]]
    %v93 = vstv %s92
    %v94 = vsel %vm91, %v93, %v79
    %s95 = sadd.s32 %s90, 100
    %s96 = sld [smem:[#allocation5 + %s95]]
    %v97 = vstv %s96
    %v98 = vsel %vm91, %v97, %v83
    %s99 = scalar_lea.vmem %s2, %s90
    %v100 = vld [vmem:[%s99] sm:$0x1]
    %v101 = vsel %vm91, 1, 0
    %vm102 = vcmp.eq.s32.totalorder %v101, 1
    %v103 = vperm.slane %v100, 0
    %v104 = vsel %vm102, %v103, %v89
    %s105 = sld [smem:[#allocation2 + $0x3]]
    %vm106 = vcmp.eq.s32.totalorder %v59, 3
    %s107 = sld [smem:[#allocation5 + %s105]]
    %v108 = vstv %s107
    %v109 = vsel %vm106, %v108, %v94
    %s110 = sadd.s32 %s105, 100
    %s111 = sld [smem:[#allocation5 + %s110]]
    %v112 = vstv %s111
    %v113 = vsel %vm106, %v112, %v98
    %s114 = scalar_lea.vmem %s2, %s105
    %v115 = vld [vmem:[%s114] sm:$0x1]
    %v116 = vsel %vm106, 1, 0
    %vm117 = vcmp.eq.s32.totalorder %v116, 1
    %v118 = vperm.slane %v115, 0
    %v119 = vsel %vm117, %v118, %v104
    %v120 = vmul.f32 %v55, %v109
    %v121 = vmul.f32 %v56, %v113
    %v122 = vadd.f32 %v120, %v121
    %v123 = vld [vmem:[%s6] sm:$0xff]
    %v124 = vld [vmem:[%s6 + $0x8] sm:$0xff]
    %v125 = vld [vmem:[%s6 + $0x10] sm:$0xff]
    %v126 = vld [vmem:[%s6 + $0x18] sm:$0xff]
    %v127 = vld [vmem:[%s6 + $0x20] sm:$0xff]
    %v128 = vld [vmem:[%s6 + $0x28] sm:$0x1]
    %vm129 = vcmask 130048
    %v131 = vsel %vm129, %v119, 0
    %133 = vmatpush.msra.mxu0 0.0
    %134 = vmatpush.msra.mxu0 0.0
    %135 = vmatpush.msra.mxu0 0.0
    %136 = vmatpush.msra.mxu0 0.0
    %137 = vmatpush.msra.mxu0 0.0
    %138 = vmatpush.msra.mxu0 0.0
    %139 = vmatpush.msra.mxu0 0.0
    %140 = vmatpush.msra.mxu0 0.0
    %141 = vmatpush.msra.mxu0 0.0
    %142 = vmatpush.msra.mxu0 0.0
    %143 = vmatpush.msra.mxu0 0.0
    %144 = vmatpush.msra.mxu0 0.0
    %145 = vmatpush.msra.mxu0 0.0
    %146 = vmatpush.msra.mxu0 0.0
    %147 = vmatpush.msra.mxu0 %v126
    %148 = vmatpush.msra.mxu0 %v125
    %149 = vmatmul.f32.gmra.mxu0 %v131
    %v150 = vpop.f32.mrf.mxu0
    %v151 = vadd.f32 0.0, %v150
    %152 = vdwg.mxu0
    %v154 = vsel %vm129, %v122, 0
    %156 = vmatpush.msra.mxu0 0.0
    %157 = vmatpush.msra.mxu0 0.0
    %158 = vmatpush.msra.mxu0 0.0
    %159 = vmatpush.msra.mxu0 0.0
    %160 = vmatpush.msra.mxu0 0.0
    %161 = vmatpush.msra.mxu0 0.0
    %162 = vmatpush.msra.mxu0 0.0
    %163 = vmatpush.msra.mxu0 0.0
    %164 = vmatpush.msra.mxu0 0.0
    %165 = vmatpush.msra.mxu0 0.0
    %166 = vmatpush.msra.mxu0 0.0
    %167 = vmatpush.msra.mxu0 0.0
    %168 = vmatpush.msra.mxu0 0.0
    %169 = vmatpush.msra.mxu0 0.0
    %170 = vmatpush.msra.mxu0 %v124
    %171 = vmatpush.msra.mxu0 %v123
    %172 = vmatmul.f32.gmra.mxu0 %v154
    %v173 = vpop.f32.mrf.mxu0
    %v174 = vadd.f32 %v151, %v173
    %175 = vdwg.mxu0
    %vm176 = vcmask 64512
    %v178 = vsel %vm176, %v57, 0
    %180 = vmatpush.msra.mxu0 0.0
    %181 = vmatpush.msra.mxu0 0.0
    %182 = vmatpush.msra.mxu0 0.0
    %183 = vmatpush.msra.mxu0 0.0
    %184 = vmatpush.msra.mxu0 0.0
    %185 = vmatpush.msra.mxu0 0.0
    %186 = vmatpush.msra.mxu0 0.0
    %187 = vmatpush.msra.mxu0 0.0
    %188 = vmatpush.msra.mxu0 0.0
    %189 = vmatpush.msra.mxu0 0.0
    %190 = vmatpush.msra.mxu0 0.0
    %191 = vmatpush.msra.mxu0 0.0
    %192 = vmatpush.msra.mxu0 0.0
    %193 = vmatpush.msra.mxu0 0.0
    %194 = vmatpush.msra.mxu0 0.0
    %195 = vmatpush.msra.mxu0 %v127
    %196 = vmatmul.f32.gmra.mxu0 %v178
    %v197 = vpop.f32.mrf.mxu0
    %v198 = vadd.f32 0.0, %v197
    %199 = vdwg.mxu0
    %v200 = vadd.f32 %v174, %v198
    %v201 = vperm.slane %v128, 0
    %v202 = vadd.f32 %v200, %v201
    %v203 = vmax.f32 %v202, 0.0
    %v204 = vld [vmem:[%s7] sm:$0xff]
    %v205 = vld [vmem:[%s7 + $0x8] sm:$0xff]
    %v206 = vld [vmem:[%s7 + $0x10] sm:$0xff]
    %v207 = vld [vmem:[%s7 + $0x18] sm:$0xff]
    %v208 = vld [vmem:[%s7 + $0x20] sm:$0x1]
    %v209 = vperm.slane %v208, 0
    %vm210 = vcmask 261120
    %v212 = vsel %vm210, %v203, 0
    %214 = vmatpush.msra.mxu0 0.0
    %215 = vmatpush.msra.mxu0 0.0
    %216 = vmatpush.msra.mxu0 0.0
    %217 = vmatpush.msra.mxu0 0.0
    %218 = vmatpush.msra.mxu0 0.0
    %219 = vmatpush.msra.mxu0 0.0
    %220 = vmatpush.msra.mxu0 0.0
    %221 = vmatpush.msra.mxu0 0.0
    %222 = vmatpush.msra.mxu0 0.0
    %223 = vmatpush.msra.mxu0 0.0
    %224 = vmatpush.msra.mxu0 0.0
    %225 = vmatpush.msra.mxu0 0.0
    %226 = vmatpush.msra.mxu0 %v207
    %227 = vmatpush.msra.mxu0 %v206
    %228 = vmatpush.msra.mxu0 %v205
    %229 = vmatpush.msra.mxu0 %v204
    %230 = vmatmul.f32.gmra.mxu0 %v212
    %v231 = vpop.f32.mrf.mxu0
    %v232 = vadd.f32 %v209, %v231
    %233 = vdwg.mxu0
    %v234 = vsub.f32 %v56, %v232
    %v235 = vmul.f32 %v234, %v234
    %vm236 = vcmask 125952
    %v237 = vsel %vm236, %v235, 0.0
    %238 = vadd.xlane.f32.xlu0 %v237
    %v239 = vpop.xlane.xlu0 %238
    %v240 = vrot.slane %v239, 4
    %v241 = vadd.f32 %v239, %v240
    %v242 = vrot.slane %v241, 2
    %v243 = vadd.f32 %v241, %v242
    %v244 = vrot.slane %v243, 1
    %v245 = vadd.f32 %v243, %v244
    %s246 = vtos %v245
    %s247 = smul.f32 %s246, 0.015625
    %s248 = scalar_lea.smem [#allocation7], 0
    %249 = sst [smem:[%s248]] %s247
    // Predicated region
    $region42: #{simple_diffusion_forward.21} parent=1 // pred_check
      _
    $region43: #{simple_diffusion_forward.21} parent=1 // pred_check_branch
      %251 = sbr.rel (0) target = $region45
    $region44: #{simple_diffusion_forward.21} parent=1 // pred_region
      %253 = vsyncadd [#allocation3], 0
      %s255 = sshll.u32 %s8, 4
      %s256 = int_to_ptr.hbm [resolvable:$true] %s255
      %258 = dma.smem_to_hbm [#allocation7], 16, %s256, [#allocation3]
    $region45: #{simple_diffusion_forward.21} parent=1 // pred_fallthru
      _
    // Predicated region
    $region46: #{simple_diffusion_forward.21} parent=1 // pred_check
      _
    $region47: #{simple_diffusion_forward.21} parent=1 // pred_check_branch
      %260 = sbr.rel (0) target = $region49
    $region48: #{simple_diffusion_forward.21} parent=1 // pred_region
      %262 = dma.done [#allocation3], 16
    $region49: #{simple_diffusion_forward.21} parent=1 // pred_fallthru
      _
    %263 = sfence
    %264 = vsyncpa [#allocation3], 1
    %265 = vsyncpa [#allocation4], 1
    %266 = vsyncpa [#allocation6], 1

</llo_original>
